<compile_context>
chip_gen: v6e
topology: v6e:2x2x1
jax: 0.10.0
libtpu: 0.0.40
codegen_flags: <defaults>
</compile_context>

<pallas_src>
import jax
import jax.numpy as jnp
from jax.experimental import pallas as pl
from jax.experimental.pallas import tpu as pltpu


# ---------------------------------------------------------------------------
# Weight packing: fuse + pre-scale + pack into one [R, 128] VMEM buffer.
# ---------------------------------------------------------------------------
def pack_params(weights, human_num):
    ws = [jnp.asarray(w, jnp.float32) for w in weights]
    (wr_w1, wr_b1, wr_w2, wr_b2,
     wh_w1, wh_b1, wh_w2, wh_b2,
     c1_hr_root, c1_hr_msg, c1_hr_b,
     c1_rh_root, c1_rh_msg, c1_rh_b,
     c1_hh_root, c1_hh_msg, c1_hh_b,
     c2_hr_root, c2_hr_msg, c2_hr_b,
     v_w1, v_b1, v_w2, v_b2) = ws

    inv_n = 1.0 / float(human_num)
    inv_nm1 = 1.0 / float(max(human_num - 1, 1))

    entries = [
        # embedding MLPs
        ("we1", wr_w1), ("be1", wr_b1), ("we2", wr_w2), ("be2", wr_b2),
        ("wh1", wh_w1), ("bh1", wh_b1), ("wh2", wh_w2), ("bh2", wh_b2),
        # GNN layer 1, robot destination: [r | h_sum] @ [[hr_root],[hr_msg/N]]
        ("w_r1", jnp.concatenate([c1_hr_root, c1_hr_msg * inv_n], axis=0)),
        ("b_r1", c1_hr_b),
        # per-batch human term: [r | h_sum] @ [[rh_msg],[hh_msg/(N-1)]] + (rh_b + hh_b)
        ("w_t", jnp.concatenate([c1_rh_msg, c1_hh_msg * inv_nm1], axis=0)),
        ("b_t", c1_rh_b + c1_hh_b),
        # per-human folded root: rh_root + hh_root - hh_msg/(N-1)
        ("w_a", c1_rh_root + c1_hh_root - c1_hh_msg * inv_nm1),
        # GNN layer 2, robot destination: [r1 | h1_sum] @ [[root],[msg/N]]
        ("w_r2", jnp.concatenate([c2_hr_root, c2_hr_msg * inv_n], axis=0)),
        ("b_r2", c2_hr_b),
        # value MLP
        ("vw1", v_w1), ("vb1", v_b1), ("vw2", v_w2), ("vb2", v_b2),
    ]

    layout = {}
    off = 0
    for name, arr in entries:
        r, c = arr.shape
        assert c <= 128
        layout[name] = (off, r, c)
        off += -(-r // 8) * 8          # 8-aligned row blocks for clean sublane slices

    buf = jnp.zeros((off, 128), jnp.float32)
    for name, arr in entries:
        o, r, c = layout[name]
        buf = buf.at[o:o + r, :c].set(arr)
    return buf, layout


# ---------------------------------------------------------------------------
# Kernel
# ---------------------------------------------------------------------------
def _make_kernel(layout, human_num):
    N = human_num

    def kernel(ss_ref, hs_ref, w_ref, out_ref, h_scr, ha_scr):
        tb = ss_ref.shape[0]                       # batch rows in this tile (static)

        def W(name):
            off, r, c = layout[name]
            return w_ref[off:off + r, :c]

        dot = lambda a, b: jnp.dot(a, b, preferred_element_type=jnp.float32)
        relu = lambda x: jnp.maximum(x, 0.0)

        ss = ss_ref[...]                           # [TB, self_dim]
        hs = hs_ref[...]                           # [TB*N, agent_dim]

        # ---- w_r / w_h embedding MLPs (last_relu=True) ----
        r = relu(dot(ss, W("we1")) + W("be1"))
        r = relu(dot(r, W("we2")) + W("be2"))      # [TB, X]
        h = relu(dot(hs, W("wh1")) + W("bh1"))
        h = relu(dot(h, W("wh2")) + W("bh2"))      # [TB*N, X]

        # Per-batch sum over humans via strided VMEM reads (no selector matmul).
        h_scr[...] = h
        h_sum = h_scr[pl.ds(0, tb, N), :]          # human 0 of every batch row
        for i in range(1, N):
            h_sum = h_sum + h_scr[pl.ds(i, tb, N), :]          # [TB, X]

        # ---- hetero GNN layer 1 (message means pre-folded into the weights) ----
        rh = jnp.concatenate([r, h_sum], axis=-1)              # [TB, 2X]
        r1 = relu(dot(rh, W("w_r1")) + W("b_r1"))              # [TB, H] robot dest
        t = dot(rh, W("w_t")) + W("b_t")                       # [TB, H] per-batch term
        ha_scr[...] = dot(h, W("w_a"))                         # [TB*N, H] per-human term

        # Layer-1 human outputs are only consumed through their per-batch sum,
        # so accumulate relu(per-human + per-batch) directly (broadcast-free).
        h1_sum = relu(ha_scr[pl.ds(0, tb, N), :] + t)
        for i in range(1, N):
            h1_sum = h1_sum + relu(ha_scr[pl.ds(i, tb, N), :] + t)   # [TB, H]

        # ---- hetero GNN layer 2 (only the robot destination feeds value_net) ----
        r2 = relu(dot(jnp.concatenate([r1, h1_sum], axis=-1), W("w_r2")) + W("b_r2"))

        # ---- value_net MLP (no ReLU after last layer) ----
        v = relu(dot(r2, W("vw1")) + W("vb1"))
        out_ref[...] = dot(v, W("vw2")) + W("vb2")

    return kernel


# ---------------------------------------------------------------------------
# Wrapper
# ---------------------------------------------------------------------------
def value_network_forward(state, packed, layout, *, self_state_dim, human_num,
                          out_dim, batch_tile=None):
    B, N, input_dim = state.shape
    assert N == human_num
    agent_dim = input_dim - self_state_dim

    tb = B if batch_tile is None else batch_tile
    assert B % tb == 0
    n_tiles = B // tb
    if n_tiles > 1:
        # Tiled row blocks must respect the (8,128) divisibility rule.
        assert tb % 8 == 0 and (tb * N) % 8 == 0

    self_state = state[:, 0, :self_state_dim]                          # [B, self_dim]
    human_flat = state[:, :, self_state_dim:].reshape(B * N, agent_dim)

    R = packed.shape[0]
    X = layout["we2"][2]      # embedding width
    H = layout["w_r1"][2]     # GNN hidden width

    return pl.pallas_call(
        _make_kernel(layout, human_num),
        out_shape=jax.ShapeDtypeStruct((B, out_dim), jnp.float32),
        grid=(n_tiles,),
        in_specs=[
            pl.BlockSpec((tb, self_state_dim), lambda i: (i, 0)),
            pl.BlockSpec((tb * N, agent_dim), lambda i: (i, 0)),
            pl.BlockSpec((R, 128), lambda i: (0, 0)),       # packed params, resident
        ],
        out_specs=pl.BlockSpec((tb, out_dim), lambda i: (i, 0)),
        scratch_shapes=[
            pltpu.VMEM((tb * N, X), jnp.float32),
            pltpu.VMEM((tb * N, H), jnp.float32),
        ],
        compiler_params=pltpu.CompilerParams(
            dimension_semantics=("parallel",)),
    )(self_state, human_flat, packed)


# ---------------------------------------------------------------------------
# Parameter init (raw, unfused layout — same order as the PyTorch module)
# ---------------------------------------------------------------------------
def init_params(key, *, input_dim, self_state_dim, wr_dims, wagent_dims,
                hidden_channels, gcn2_w1_dim, planning_dims):
    agent_dim = input_dim - self_state_dim
    X = wr_dims[-1]

    def lin(k, fan_in, fan_out):
        kw, kb = jax.random.split(k)
        s = 1.0 / (fan_in ** 0.5)
        Wt = jax.random.uniform(kw, (fan_in, fan_out), jnp.float32, -s, s)
        b = jax.random.uniform(kb, (1, fan_out), jnp.float32, -s, s)
        return Wt, b

    keys = jax.random.split(key, 16)
    w = []
    # w_r MLP
    Wt, b = lin(keys[0], self_state_dim, wr_dims[0]); w += [Wt, b]
    Wt, b = lin(keys[1], wr_dims[0], wr_dims[1]); w += [Wt, b]
    # w_h MLP
    Wt, b = lin(keys[2], agent_dim, wagent_dims[0]); w += [Wt, b]
    Wt, b = lin(keys[3], wagent_dims[0], wagent_dims[1]); w += [Wt, b]
    # conv1: 3 edge types (h->r, r->h, h->h): root, msg, bias each
    for i in range(3):
        Wr, _ = lin(keys[4 + 2 * i], X, hidden_channels)
        Wm, bb = lin(keys[5 + 2 * i], X, hidden_channels)
        w += [Wr, Wm, bb]
    # conv2: only the (human->robot) copy is needed for the robot output
    Wr, _ = lin(keys[10], hidden_channels, gcn2_w1_dim)
    Wm, bb = lin(keys[11], hidden_channels, gcn2_w1_dim)
    w += [Wr, Wm, bb]
    # value_net MLP
    Wt, b = lin(keys[12], gcn2_w1_dim, planning_dims[0]); w += [Wt, b]
    Wt, b = lin(keys[13], planning_dims[0], planning_dims[1]); w += [Wt, b]
    return w


# ---------------------------------------------------------------------------
# Pure-JAX reference (validated against the module semantics)
# ---------------------------------------------------------------------------
def reference_forward(state, weights, *, self_state_dim, human_num):
    (wr_w1, wr_b1, wr_w2, wr_b2,
     wh_w1, wh_b1, wh_w2, wh_b2,
     c1_hr_root, c1_hr_msg, c1_hr_b,
     c1_rh_root, c1_rh_msg, c1_rh_b,
     c1_hh_root, c1_hh_msg, c1_hh_b,
     c2_hr_root, c2_hr_msg, c2_hr_b,
     v_w1, v_b1, v_w2, v_b2) = weights
    B, N, input_dim = state.shape
    relu = lambda x: jnp.maximum(x, 0.0)
    ss = state[:, 0, :self_state_dim]
    hs = state[:, :, self_state_dim:]                        # [B, N, agent_dim]
    r = relu(relu(ss @ wr_w1 + wr_b1) @ wr_w2 + wr_b2)       # [B, X]
    h = relu(relu(hs @ wh_w1 + wh_b1) @ wh_w2 + wh_b2)       # [B, N, X]
    h_mean = h.mean(axis=1)                                  # [B, X]
    r1 = relu(r @ c1_hr_root + h_mean @ c1_hr_msg + c1_hr_b)
    others = (h.sum(axis=1, keepdims=True) - h) / max(N - 1, 1)
    h1 = relu(h @ c1_rh_root + (r[:, None, :] @ c1_rh_msg) + c1_rh_b
              + h @ c1_hh_root + others @ c1_hh_msg + c1_hh_b)
    r2 = relu(r1 @ c2_hr_root + h1.mean(axis=1) @ c2_hr_msg + c2_hr_b)
    v = relu(r2 @ v_w1 + v_b1) @ v_w2 + v_b2
    return v


if __name__ == "__main__":
    # Small, crowd_nav-consistent shapes.
    B, human_num = 4, 5
    input_dim, self_state_dim = 13, 6              # agent_state_dim = 7
    wr_dims = [32, 32]
    wagent_dims = [32, 32]
    hidden_channels = 50                           # fixed in the original module
    gcn2_w1_dim = 32
    planning_dims = [32, 1]

    key = jax.random.PRNGKey(0)
    k_state, k_par = jax.random.split(key)
    state = jax.random.normal(k_state, (B, human_num, input_dim), jnp.float32)
    weights = init_params(k_par, input_dim=input_dim, self_state_dim=self_state_dim,
                          wr_dims=wr_dims, wagent_dims=wagent_dims,
                          hidden_channels=hidden_channels, gcn2_w1_dim=gcn2_w1_dim,
                          planning_dims=planning_dims)

    # Pack (fuse + pre-scale) once at init time.
    packed, layout = pack_params(weights, human_num)

    value = value_network_forward(state, packed, layout,
                                  self_state_dim=self_state_dim,
                                  human_num=human_num,
                                  out_dim=planning_dims[-1])
    value = jax.block_until_ready(value)

    ref = reference_forward(state, weights, self_state_dim=self_state_dim,
                            human_num=human_num)
    assert value.shape == (B, planning_dims[-1])
    assert jnp.allclose(value, ref, rtol=1e-4, atol=1e-4), (value, ref)
    print("KERNEL_OK")
</pallas_src>

<mosaic_0001>
module attributes {stable_mosaic.version = 11 : i64} {
  func.func @kernel(%arg0: i32, %arg1: memref<4x6xf32, #tpu.memory_space<vmem>>, %arg2: memref<20x7xf32, #tpu.memory_space<vmem>>, %arg3: memref<480x128xf32, #tpu.memory_space<vmem>>, %arg4: memref<4x1xf32, #tpu.memory_space<vmem>>, %arg5: memref<20x32xf32, #tpu.memory_space<vmem>>, %arg6: memref<20x50xf32, #tpu.memory_space<vmem>>) attributes {dimension_semantics = [#tpu.dimension_semantics<parallel>], iteration_bounds = array<i64: 1>, scalar_prefetch = 0 : i64, scratch_operands = 2 : i64, tpu.core_type = #tpu.core_type<tc>, window_params = [{transform_indices = @transform_0, window_bounds = array<i64: 4, 6>}, {transform_indices = @transform_1, window_bounds = array<i64: 20, 7>}, {pipeline_mode = #tpu.pipeline_mode<synchronous>, transform_indices = @transform_2, window_bounds = array<i64: 480, 128>}, {transform_indices = @transform_3, window_bounds = array<i64: 4, 1>}]} {
    %c0 = arith.constant 0 : index
    %c0_0 = arith.constant 0 : index
    %0 = vector.load %arg1[%c0, %c0_0] : memref<4x6xf32, #tpu.memory_space<vmem>>, vector<4x6xf32>
    %c0_1 = arith.constant 0 : index
    %c0_2 = arith.constant 0 : index
    %1 = vector.load %arg2[%c0_1, %c0_2] : memref<20x7xf32, #tpu.memory_space<vmem>>, vector<20x7xf32>
    %c0_3 = arith.constant 0 : index
    %c0_4 = arith.constant 0 : index
    %2 = vector.load %arg3[%c0_3, %c0_4] : memref<480x128xf32, #tpu.memory_space<vmem>>, vector<6x32xf32>
    %cst = arith.constant dense<0.000000e+00> : vector<4x32xf32>
    %3 = tpu.matmul %0, %2, %cst {dimension_numbers = #tpu.dot_dimension_numbers<[1], [0], [0], [1], [0, 0, 1, 1], [], []>} : vector<4x6xf32>, vector<6x32xf32>, vector<4x32xf32> -> vector<4x32xf32>
    %c8 = arith.constant 8 : index
    %c0_5 = arith.constant 0 : index
    %4 = vector.load %arg3[%c8, %c0_5] : memref<480x128xf32, #tpu.memory_space<vmem>>, vector<1x32xf32>
    %5 = vector.broadcast %4 : vector<1x32xf32> to vector<4x32xf32>
    %6 = arith.addf %3, %5 : vector<4x32xf32>
    %cst_6 = arith.constant 0.000000e+00 : f32
    %7 = vector.broadcast %cst_6 : f32 to vector<4x32xf32>
    %8 = arith.maximumf %6, %7 : vector<4x32xf32>
    %c16 = arith.constant 16 : index
    %c0_7 = arith.constant 0 : index
    %9 = vector.load %arg3[%c16, %c0_7] : memref<480x128xf32, #tpu.memory_space<vmem>>, vector<32x32xf32>
    %cst_8 = arith.constant dense<0.000000e+00> : vector<4x32xf32>
    %10 = tpu.matmul %8, %9, %cst_8 {dimension_numbers = #tpu.dot_dimension_numbers<[1], [0], [0], [1], [0, 0, 1, 1], [], []>} : vector<4x32xf32>, vector<32x32xf32>, vector<4x32xf32> -> vector<4x32xf32>
    %c48 = arith.constant 48 : index
    %c0_9 = arith.constant 0 : index
    %11 = vector.load %arg3[%c48, %c0_9] : memref<480x128xf32, #tpu.memory_space<vmem>>, vector<1x32xf32>
    %12 = vector.broadcast %11 : vector<1x32xf32> to vector<4x32xf32>
    %13 = arith.addf %10, %12 : vector<4x32xf32>
    %cst_10 = arith.constant 0.000000e+00 : f32
    %14 = vector.broadcast %cst_10 : f32 to vector<4x32xf32>
    %15 = arith.maximumf %13, %14 : vector<4x32xf32>
    %c56 = arith.constant 56 : index
    %c0_11 = arith.constant 0 : index
    %16 = vector.load %arg3[%c56, %c0_11] : memref<480x128xf32, #tpu.memory_space<vmem>>, vector<7x32xf32>
    %cst_12 = arith.constant dense<0.000000e+00> : vector<20x32xf32>
    %17 = tpu.matmul %1, %16, %cst_12 {dimension_numbers = #tpu.dot_dimension_numbers<[1], [0], [0], [1], [0, 0, 1, 1], [], []>} : vector<20x7xf32>, vector<7x32xf32>, vector<20x32xf32> -> vector<20x32xf32>
    %c64 = arith.constant 64 : index
    %c0_13 = arith.constant 0 : index
    %18 = vector.load %arg3[%c64, %c0_13] : memref<480x128xf32, #tpu.memory_space<vmem>>, vector<1x32xf32>
    %19 = vector.broadcast %18 : vector<1x32xf32> to vector<20x32xf32>
    %20 = arith.addf %17, %19 : vector<20x32xf32>
    %cst_14 = arith.constant 0.000000e+00 : f32
    %21 = vector.broadcast %cst_14 : f32 to vector<20x32xf32>
    %22 = arith.maximumf %20, %21 : vector<20x32xf32>
    %c72 = arith.constant 72 : index
    %c0_15 = arith.constant 0 : index
    %23 = vector.load %arg3[%c72, %c0_15] : memref<480x128xf32, #tpu.memory_space<vmem>>, vector<32x32xf32>
    %cst_16 = arith.constant dense<0.000000e+00> : vector<20x32xf32>
    %24 = tpu.matmul %22, %23, %cst_16 {dimension_numbers = #tpu.dot_dimension_numbers<[1], [0], [0], [1], [0, 0, 1, 1], [], []>} : vector<20x32xf32>, vector<32x32xf32>, vector<20x32xf32> -> vector<20x32xf32>
    %c104 = arith.constant 104 : index
    %c0_17 = arith.constant 0 : index
    %25 = vector.load %arg3[%c104, %c0_17] : memref<480x128xf32, #tpu.memory_space<vmem>>, vector<1x32xf32>
    %26 = vector.broadcast %25 : vector<1x32xf32> to vector<20x32xf32>
    %27 = arith.addf %24, %26 : vector<20x32xf32>
    %cst_18 = arith.constant 0.000000e+00 : f32
    %28 = vector.broadcast %cst_18 : f32 to vector<20x32xf32>
    %29 = arith.maximumf %27, %28 : vector<20x32xf32>
    %c0_19 = arith.constant 0 : index
    %c0_20 = arith.constant 0 : index
    %30 = vector.load %arg5[%c0_19, %c0_20] : memref<20x32xf32, #tpu.memory_space<vmem>>, vector<20x32xf32>
    tpu.vector_store %arg5[%c0_19, %c0_20], %29 {strides = array<i32>} : memref<20x32xf32, #tpu.memory_space<vmem>>, vector<20x32xf32>,
    %c0_21 = arith.constant 0 : index
    %c0_22 = arith.constant 0 : index
    %31 = tpu.strided_load %arg5[%c0_21, %c0_22] {strides = array<i32: 5, 1>} : memref<20x32xf32, #tpu.memory_space<vmem>>, vector<4x32xf32>
    %c1 = arith.constant 1 : index
    %c0_23 = arith.constant 0 : index
    %32 = tpu.strided_load %arg5[%c1, %c0_23] {strides = array<i32: 5, 1>} : memref<20x32xf32, #tpu.memory_space<vmem>>, vector<4x32xf32>
    %33 = arith.addf %31, %32 : vector<4x32xf32>
    %c2 = arith.constant 2 : index
    %c0_24 = arith.constant 0 : index
    %34 = tpu.strided_load %arg5[%c2, %c0_24] {strides = array<i32: 5, 1>} : memref<20x32xf32, #tpu.memory_space<vmem>>, vector<4x32xf32>
    %35 = arith.addf %33, %34 : vector<4x32xf32>
    %c3 = arith.constant 3 : index
    %c0_25 = arith.constant 0 : index
    %36 = tpu.strided_load %arg5[%c3, %c0_25] {strides = array<i32: 5, 1>} : memref<20x32xf32, #tpu.memory_space<vmem>>, vector<4x32xf32>
    %37 = arith.addf %35, %36 : vector<4x32xf32>
    %c4 = arith.constant 4 : index
    %c0_26 = arith.constant 0 : index
    %38 = tpu.strided_load %arg5[%c4, %c0_26] {strides = array<i32: 5, 1>} : memref<20x32xf32, #tpu.memory_space<vmem>>, vector<4x32xf32>
    %39 = arith.addf %37, %38 : vector<4x32xf32>
    %40 = tpu.concatenate %15, %39 in 1 : vector<4x32xf32>, vector<4x32xf32> -> vector<4x64xf32>
    %c112 = arith.constant 112 : index
    %c0_27 = arith.constant 0 : index
    %41 = vector.load %arg3[%c112, %c0_27] : memref<480x128xf32, #tpu.memory_space<vmem>>, vector<64x50xf32>
    %cst_28 = arith.constant dense<0.000000e+00> : vector<4x50xf32>
    %42 = tpu.matmul %40, %41, %cst_28 {dimension_numbers = #tpu.dot_dimension_numbers<[1], [0], [0], [1], [0, 0, 1, 1], [], []>} : vector<4x64xf32>, vector<64x50xf32>, vector<4x50xf32> -> vector<4x50xf32>
    %c176 = arith.constant 176 : index
    %c0_29 = arith.constant 0 : index
    %43 = vector.load %arg3[%c176, %c0_29] : memref<480x128xf32, #tpu.memory_space<vmem>>, vector<1x50xf32>
    %44 = vector.broadcast %43 : vector<1x50xf32> to vector<4x50xf32>
    %45 = arith.addf %42, %44 : vector<4x50xf32>
    %cst_30 = arith.constant 0.000000e+00 : f32
    %46 = vector.broadcast %cst_30 : f32 to vector<4x50xf32>
    %47 = arith.maximumf %45, %46 : vector<4x50xf32>
    %c184 = arith.constant 184 : index
    %c0_31 = arith.constant 0 : index
    %48 = vector.load %arg3[%c184, %c0_31] : memref<480x128xf32, #tpu.memory_space<vmem>>, vector<64x50xf32>
    %cst_32 = arith.constant dense<0.000000e+00> : vector<4x50xf32>
    %49 = tpu.matmul %40, %48, %cst_32 {dimension_numbers = #tpu.dot_dimension_numbers<[1], [0], [0], [1], [0, 0, 1, 1], [], []>} : vector<4x64xf32>, vector<64x50xf32>, vector<4x50xf32> -> vector<4x50xf32>
    %c248 = arith.constant 248 : index
    %c0_33 = arith.constant 0 : index
    %50 = vector.load %arg3[%c248, %c0_33] : memref<480x128xf32, #tpu.memory_space<vmem>>, vector<1x50xf32>
    %51 = vector.broadcast %50 : vector<1x50xf32> to vector<4x50xf32>
    %52 = arith.addf %49, %51 : vector<4x50xf32>
    %c256 = arith.constant 256 : index
    %c0_34 = arith.constant 0 : index
    %53 = vector.load %arg3[%c256, %c0_34] : memref<480x128xf32, #tpu.memory_space<vmem>>, vector<32x50xf32>
    %cst_35 = arith.constant dense<0.000000e+00> : vector<20x50xf32>
    %54 = tpu.matmul %29, %53, %cst_35 {dimension_numbers = #tpu.dot_dimension_numbers<[1], [0], [0], [1], [0, 0, 1, 1], [], []>} : vector<20x32xf32>, vector<32x50xf32>, vector<20x50xf32> -> vector<20x50xf32>
    %c0_36 = arith.constant 0 : index
    %c0_37 = arith.constant 0 : index
    %55 = vector.load %arg6[%c0_36, %c0_37] : memref<20x50xf32, #tpu.memory_space<vmem>>, vector<20x50xf32>
    tpu.vector_store %arg6[%c0_36, %c0_37], %54 {strides = array<i32>} : memref<20x50xf32, #tpu.memory_space<vmem>>, vector<20x50xf32>,
    %c0_38 = arith.constant 0 : index
    %c0_39 = arith.constant 0 : index
    %56 = tpu.strided_load %arg6[%c0_38, %c0_39] {strides = array<i32: 5, 1>} : memref<20x50xf32, #tpu.memory_space<vmem>>, vector<4x50xf32>
    %57 = arith.addf %56, %52 : vector<4x50xf32>
    %cst_40 = arith.constant 0.000000e+00 : f32
    %58 = vector.broadcast %cst_40 : f32 to vector<4x50xf32>
    %59 = arith.maximumf %57, %58 : vector<4x50xf32>
    %c1_41 = arith.constant 1 : index
    %c0_42 = arith.constant 0 : index
    %60 = tpu.strided_load %arg6[%c1_41, %c0_42] {strides = array<i32: 5, 1>} : memref<20x50xf32, #tpu.memory_space<vmem>>, vector<4x50xf32>
    %61 = arith.addf %60, %52 : vector<4x50xf32>
    %cst_43 = arith.constant 0.000000e+00 : f32
    %62 = vector.broadcast %cst_43 : f32 to vector<4x50xf32>
    %63 = arith.maximumf %61, %62 : vector<4x50xf32>
    %64 = arith.addf %59, %63 : vector<4x50xf32>
    %c2_44 = arith.constant 2 : index
    %c0_45 = arith.constant 0 : index
    %65 = tpu.strided_load %arg6[%c2_44, %c0_45] {strides = array<i32: 5, 1>} : memref<20x50xf32, #tpu.memory_space<vmem>>, vector<4x50xf32>
    %66 = arith.addf %65, %52 : vector<4x50xf32>
    %cst_46 = arith.constant 0.000000e+00 : f32
    %67 = vector.broadcast %cst_46 : f32 to vector<4x50xf32>
    %68 = arith.maximumf %66, %67 : vector<4x50xf32>
    %69 = arith.addf %64, %68 : vector<4x50xf32>
    %c3_47 = arith.constant 3 : index
    %c0_48 = arith.constant 0 : index
    %70 = tpu.strided_load %arg6[%c3_47, %c0_48] {strides = array<i32: 5, 1>} : memref<20x50xf32, #tpu.memory_space<vmem>>, vector<4x50xf32>
    %71 = arith.addf %70, %52 : vector<4x50xf32>
    %cst_49 = arith.constant 0.000000e+00 : f32
    %72 = vector.broadcast %cst_49 : f32 to vector<4x50xf32>
    %73 = arith.maximumf %71, %72 : vector<4x50xf32>
    %74 = arith.addf %69, %73 : vector<4x50xf32>
    %c4_50 = arith.constant 4 : index
    %c0_51 = arith.constant 0 : index
    %75 = tpu.strided_load %arg6[%c4_50, %c0_51] {strides = array<i32: 5, 1>} : memref<20x50xf32, #tpu.memory_space<vmem>>, vector<4x50xf32>
    %76 = arith.addf %75, %52 : vector<4x50xf32>
    %cst_52 = arith.constant 0.000000e+00 : f32
    %77 = vector.broadcast %cst_52 : f32 to vector<4x50xf32>
    %78 = arith.maximumf %76, %77 : vector<4x50xf32>
    %79 = arith.addf %74, %78 : vector<4x50xf32>
    %80 = tpu.concatenate %47, %79 in 1 : vector<4x50xf32>, vector<4x50xf32> -> vector<4x100xf32>
    %c288 = arith.constant 288 : index
    %c0_53 = arith.constant 0 : index
    %81 = vector.load %arg3[%c288, %c0_53] : memref<480x128xf32, #tpu.memory_space<vmem>>, vector<100x32xf32>
    %cst_54 = arith.constant dense<0.000000e+00> : vector<4x32xf32>
    %82 = tpu.matmul %80, %81, %cst_54 {dimension_numbers = #tpu.dot_dimension_numbers<[1], [0], [0], [1], [0, 0, 1, 1], [], []>} : vector<4x100xf32>, vector<100x32xf32>, vector<4x32xf32> -> vector<4x32xf32>
    %c392 = arith.constant 392 : index
    %c0_55 = arith.constant 0 : index
    %83 = vector.load %arg3[%c392, %c0_55] : memref<480x128xf32, #tpu.memory_space<vmem>>, vector<1x32xf32>
    %84 = vector.broadcast %83 : vector<1x32xf32> to vector<4x32xf32>
    %85 = arith.addf %82, %84 : vector<4x32xf32>
    %cst_56 = arith.constant 0.000000e+00 : f32
    %86 = vector.broadcast %cst_56 : f32 to vector<4x32xf32>
    %87 = arith.maximumf %85, %86 : vector<4x32xf32>
    %c400 = arith.constant 400 : index
    %c0_57 = arith.constant 0 : index
    %88 = vector.load %arg3[%c400, %c0_57] : memref<480x128xf32, #tpu.memory_space<vmem>>, vector<32x32xf32>
    %cst_58 = arith.constant dense<0.000000e+00> : vector<4x32xf32>
    %89 = tpu.matmul %87, %88, %cst_58 {dimension_numbers = #tpu.dot_dimension_numbers<[1], [0], [0], [1], [0, 0, 1, 1], [], []>} : vector<4x32xf32>, vector<32x32xf32>, vector<4x32xf32> -> vector<4x32xf32>
    %c432 = arith.constant 432 : index
    %c0_59 = arith.constant 0 : index
    %90 = vector.load %arg3[%c432, %c0_59] : memref<480x128xf32, #tpu.memory_space<vmem>>, vector<1x32xf32>
    %91 = vector.broadcast %90 : vector<1x32xf32> to vector<4x32xf32>
    %92 = arith.addf %89, %91 : vector<4x32xf32>
    %cst_60 = arith.constant 0.000000e+00 : f32
    %93 = vector.broadcast %cst_60 : f32 to vector<4x32xf32>
    %94 = arith.maximumf %92, %93 : vector<4x32xf32>
    %c440 = arith.constant 440 : index
    %c0_61 = arith.constant 0 : index
    %95 = vector.load %arg3[%c440, %c0_61] : memref<480x128xf32, #tpu.memory_space<vmem>>, vector<32x1xf32>
    %cst_62 = arith.constant dense<0.000000e+00> : vector<4x1xf32>
    %96 = tpu.matmul %94, %95, %cst_62 {dimension_numbers = #tpu.dot_dimension_numbers<[1], [0], [0], [1], [0, 0, 1, 1], [], []>} : vector<4x32xf32>, vector<32x1xf32>, vector<4x1xf32> -> vector<4x1xf32>
    %c472 = arith.constant 472 : index
    %c0_63 = arith.constant 0 : index
    %97 = vector.load %arg3[%c472, %c0_63] : memref<480x128xf32, #tpu.memory_space<vmem>>, vector<1x1xf32>
    %98 = vector.broadcast %97 : vector<1x1xf32> to vector<4x1xf32>
    %99 = arith.addf %96, %98 : vector<4x1xf32>
    %c0_64 = arith.constant 0 : index
    %c0_65 = arith.constant 0 : index
    %100 = vector.load %arg4[%c0_64, %c0_65] : memref<4x1xf32, #tpu.memory_space<vmem>>, vector<4x1xf32>
    tpu.vector_store %arg4[%c0_64, %c0_65], %99 {strides = array<i32>} : memref<4x1xf32, #tpu.memory_space<vmem>>, vector<4x1xf32>,
    return
  }
  func.func @transform_0(%arg0: i32) -> (i32, i32) {
    %c0_i32 = arith.constant 0 : i32
    %c0_i32_0 = arith.constant 0 : i32
    return %arg0, %c0_i32 : i32, i32
  }
  func.func @transform_1(%arg0: i32) -> (i32, i32) {
    %c0_i32 = arith.constant 0 : i32
    %c0_i32_0 = arith.constant 0 : i32
    return %arg0, %c0_i32 : i32, i32
  }
  func.func @transform_2(%arg0: i32) -> (i32, i32) {
    %c0_i32 = arith.constant 0 : i32
    %c0_i32_0 = arith.constant 0 : i32
    %c0_i32_1 = arith.constant 0 : i32
    return %c0_i32, %c0_i32_0 : i32, i32
  }
  func.func @transform_3(%arg0: i32) -> (i32, i32) {
    %c0_i32 = arith.constant 0 : i32
    %c0_i32_0 = arith.constant 0 : i32
    return %arg0, %c0_i32 : i32, i32
  }
}

</mosaic_0001>

<llo_original>
// kernel: tpu_custom_call.1
$region0: #{tpu_custom_call.1}
  #allocation0 [shape = 'u32[]', space=smem, size = 0x4, offset = 0x4, fixed_abs, tag = 'smem constant byte address 0x4 - core index']
  #allocation1 [shape = 'u32[144,128]{1,0:T(1,128)}', space=vmem, size = 0x12000, scoped, tag = 'internal scratch']
  #allocation2 [shape = 'f32[20,32]{1,0:T(8,128)}', space=vmem, size = 0x3000, scoped, tag = 'scratch operand']
  #allocation3 [shape = 'f32[20,50]{1,0:T(8,128)}', space=vmem, size = 0x3000, scoped, tag = 'scratch operand']
  %s0 = inlined_call_operand.vmem [shape: f32[4,6], index: 0, kind: input, shape index: {}]
  %s1 = inlined_call_operand.vmem [shape: f32[20,7], index: 1, kind: input, shape index: {}]
  %s2 = inlined_call_operand.hbm [shape: f32[480,128], index: 2, kind: input, shape index: {}]
  %s3 = inlined_call_operand.vmem [shape: f32[4,1], index: 3, kind: output, shape index: {}]
  %s4 = sld [smem:[#allocation0]]
  $region26: #{tpu_custom_call.1} parent=0
    _
  %s6 = ssub.s32 1, %s4
  %s7 = scalar_select 0, %s6, %s4
  $region1: #{tpu_custom_call.1} parent=0
    #allocation4 [shape = 'u8[245760]{0}', space=vmem, size = 0x3c000, scoped, tag = 'input window, operand 2, single buffered']
    #allocation5 [shape = 's32[1]{0}', space=sflag, size = 0x4, scoped, tag = 'scoped memory for tpu_custom_call.1']
    %8 = vsyncpa [#allocation5], 0
    // Predicated region
    $region2: #{tpu_custom_call.1} parent=1 // pred_check
      _
    $region3: #{tpu_custom_call.1} parent=1 // pred_check_branch
      %10 = sbr.rel (0) target = $region5
    $region4: #{tpu_custom_call.1} parent=1 // pred_region
      _
    $region5: #{tpu_custom_call.1} parent=1 // pred_fallthru
      _
    // Predicated region
    $region6: #{tpu_custom_call.1} parent=1 // pred_check
      _
    $region7: #{tpu_custom_call.1} parent=1 // pred_check_branch
      %12 = sbr.rel (0) target = $region9
    $region8: #{tpu_custom_call.1} parent=1 // pred_region
      _
    $region9: #{tpu_custom_call.1} parent=1 // pred_fallthru
      _
    // Predicated region
    $region10: #{tpu_custom_call.1} parent=1 // pred_check
      _
    $region11: #{tpu_custom_call.1} parent=1 // pred_check_branch
      %14 = sbr.rel (0) target = $region13
    $region12: #{tpu_custom_call.1} parent=1 // pred_region
      %s16 = ssub.s32 7680, 7680
      %17 = vsyncadd [#allocation5], %s16
      %s18 = sshll.u32 [#allocation4], 4
      %s19 = int_to_ptr.vmem [resolvable:$true] %s18
      %24 = dma.hbm_to_vmem [thread:$0]  %s2, 7680, %s19, [#allocation5], 128, 128, 8
    $region13: #{tpu_custom_call.1} parent=1 // pred_fallthru
      _
    // Predicated region
    $region14: #{tpu_custom_call.1} parent=1 // pred_check
      _
    $region15: #{tpu_custom_call.1} parent=1 // pred_check_branch
      %26 = sbr.rel (0) target = $region17
    $region16: #{tpu_custom_call.1} parent=1 // pred_region
      %27 = dma.done [#allocation5], 7680
    $region17: #{tpu_custom_call.1} parent=1 // pred_fallthru
      _
    %v28 = vld [vmem:[%s0] sm:$0xf]
    %v29 = vld [vmem:[%s1] sm:$0xff]
    %v30 = vld [vmem:[%s1 + $0x8] sm:$0xff]
    %v31 = vld [vmem:[%s1 + $0x10] sm:$0xf]
    %v32 = vld [vmem:[#allocation4] sm:$0x3f]
    %v33 = vld [vmem:[#allocation4 + $0x8] sm:$0x1]
    %v34 = vlaneseq
    %v35 = vshrl.u32 %v34, 7
    %v36 = vsub.s32 0, %v35
    %v37 = vrot.slane %v33, %v36
    %vm38 = vcmask 48128
    %v40 = vsel %vm38, %v28, 0
    %vm42 = vcmask 1045504
    %v44 = vsel %vm42, %v32, 0
    %46 = vmatprep.subr.mxu0 0.0
    %47 = vmatpush1.msra.mxu0 0.0
    %48 = vmatprep.subr.mxu0 0.0
    %49 = vmatpush1.msra.mxu0 0.0
    %50 = vmatprep.subr.mxu0 0.0
    %51 = vmatpush1.msra.mxu0 0.0
    %52 = vmatprep.subr.mxu0 0.0
    %53 = vmatpush1.msra.mxu0 0.0
    %54 = vmatprep.subr.mxu0 0.0
    %55 = vmatpush1.msra.mxu0 0.0
    %56 = vmatprep.subr.mxu0 0.0
    %57 = vmatpush1.msra.mxu0 0.0
    %58 = vmatprep.subr.mxu0 0.0
    %59 = vmatpush1.msra.mxu0 0.0
    %60 = vmatprep.subr.mxu0 0.0
    %61 = vmatpush1.msra.mxu0 0.0
    %62 = vmatprep.subr.mxu0 0.0
    %63 = vmatpush1.msra.mxu0 0.0
    %64 = vmatprep.subr.mxu0 0.0
    %65 = vmatpush1.msra.mxu0 0.0
    %66 = vmatprep.subr.mxu0 0.0
    %67 = vmatpush1.msra.mxu0 0.0
    %68 = vmatprep.subr.mxu0 0.0
    %69 = vmatpush1.msra.mxu0 0.0
    %70 = vmatprep.subr.mxu0 0.0
    %71 = vmatpush1.msra.mxu0 0.0
    %72 = vmatprep.subr.mxu0 0.0
    %73 = vmatpush1.msra.mxu0 0.0
    %74 = vmatprep.subr.mxu0 0.0
    %75 = vmatpush1.msra.mxu0 0.0
    %76 = vmatprep.subr.mxu0 0.0
    %77 = vmatpush1.msra.mxu0 %v44
    %78 = vmatprep.subr.mxu0 0.0
    %79 = vmatpush2.msra.mxu0 0.0
    %80 = vmatprep.subr.mxu0 0.0
    %81 = vmatpush2.msra.mxu0 0.0
    %82 = vmatprep.subr.mxu0 0.0
    %83 = vmatpush2.msra.mxu0 0.0
    %84 = vmatprep.subr.mxu0 0.0
    %85 = vmatpush2.msra.mxu0 0.0
    %86 = vmatprep.subr.mxu0 0.0
    %87 = vmatpush2.msra.mxu0 0.0
    %88 = vmatprep.subr.mxu0 0.0
    %89 = vmatpush2.msra.mxu0 0.0
    %90 = vmatprep.subr.mxu0 0.0
    %91 = vmatpush2.msra.mxu0 0.0
    %92 = vmatprep.subr.mxu0 0.0
    %93 = vmatpush2.msra.mxu0 0.0
    %94 = vmatprep.subr.mxu0 0.0
    %95 = vmatpush2.msra.mxu0 0.0
    %96 = vmatprep.subr.mxu0 0.0
    %97 = vmatpush2.msra.mxu0 0.0
    %98 = vmatprep.subr.mxu0 0.0
    %99 = vmatpush2.msra.mxu0 0.0
    %100 = vmatprep.subr.mxu0 0.0
    %101 = vmatpush2.msra.mxu0 0.0
    %102 = vmatprep.subr.mxu0 0.0
    %103 = vmatpush2.msra.mxu0 0.0
    %104 = vmatprep.subr.mxu0 0.0
    %105 = vmatpush2.msra.mxu0 0.0
    %106 = vmatprep.subr.mxu0 0.0
    %107 = vmatpush2.msra.mxu0 0.0
    %108 = vmatprep.subr.mxu0 0.0
    %109 = vmatpush2.msra.mxu0 0.0
    %110 = vmatprep.mubr.f32.mxu0 0.0
    %111 = vmatmul.mubr.f32.gmra.mxu0 %v40
    %v112 = vpop.f32.mrf.mxu0
    %v113 = vadd.f32 %v37, %v112
    %v114 = vpop.f32.mrf.mxu0
    %115 = vdwg.mxu0
    %v116 = vmax.f32 %v113, 0.0
    %v117 = vld [vmem:[#allocation4 + $0x10] sm:$0xff]
    %v118 = vld [vmem:[#allocation4 + $0x18] sm:$0xff]
    %v119 = vld [vmem:[#allocation4 + $0x20] sm:$0xff]
    %v120 = vld [vmem:[#allocation4 + $0x28] sm:$0xff]
    %v121 = vld [vmem:[#allocation4 + $0x30] sm:$0x1]
    %v122 = vlaneseq
    %v123 = vshrl.u32 %v122, 7
    %v124 = vsub.s32 0, %v123
    %v125 = vrot.slane %v121, %v124
    %vm126 = vcmask 261120
    %v128 = vsel %vm126, %v116, 0
    %130 = vmatprep.subr.mxu0 0.0
    %131 = vmatpush1.msra.mxu0 0.0
    %132 = vmatprep.subr.mxu0 0.0
    %133 = vmatpush1.msra.mxu0 0.0
    %134 = vmatprep.subr.mxu0 0.0
    %135 = vmatpush1.msra.mxu0 0.0
    %136 = vmatprep.subr.mxu0 0.0
    %137 = vmatpush1.msra.mxu0 0.0
    %138 = vmatprep.subr.mxu0 0.0
    %139 = vmatpush1.msra.mxu0 0.0
    %140 = vmatprep.subr.mxu0 0.0
    %141 = vmatpush1.msra.mxu0 0.0
    %142 = vmatprep.subr.mxu0 0.0
    %143 = vmatpush1.msra.mxu0 0.0
    %144 = vmatprep.subr.mxu0 0.0
    %145 = vmatpush1.msra.mxu0 0.0
    %146 = vmatprep.subr.mxu0 0.0
    %147 = vmatpush1.msra.mxu0 0.0
    %148 = vmatprep.subr.mxu0 0.0
    %149 = vmatpush1.msra.mxu0 0.0
    %150 = vmatprep.subr.mxu0 0.0
    %151 = vmatpush1.msra.mxu0 0.0
    %152 = vmatprep.subr.mxu0 0.0
    %153 = vmatpush1.msra.mxu0 0.0
    %154 = vmatprep.subr.mxu0 0.0
    %155 = vmatpush1.msra.mxu0 %v120
    %156 = vmatprep.subr.mxu0 0.0
    %157 = vmatpush1.msra.mxu0 %v119
    %158 = vmatprep.subr.mxu0 0.0
    %159 = vmatpush1.msra.mxu0 %v118
    %160 = vmatprep.subr.mxu0 0.0
    %161 = vmatpush1.msra.mxu0 %v117
    %162 = vmatprep.subr.mxu0 0.0
    %163 = vmatpush2.msra.mxu0 0.0
    %164 = vmatprep.subr.mxu0 0.0
    %165 = vmatpush2.msra.mxu0 0.0
    %166 = vmatprep.subr.mxu0 0.0
    %167 = vmatpush2.msra.mxu0 0.0
    %168 = vmatprep.subr.mxu0 0.0
    %169 = vmatpush2.msra.mxu0 0.0
    %170 = vmatprep.subr.mxu0 0.0
    %171 = vmatpush2.msra.mxu0 0.0
    %172 = vmatprep.subr.mxu0 0.0
    %173 = vmatpush2.msra.mxu0 0.0
    %174 = vmatprep.subr.mxu0 0.0
    %175 = vmatpush2.msra.mxu0 0.0
    %176 = vmatprep.subr.mxu0 0.0
    %177 = vmatpush2.msra.mxu0 0.0
    %178 = vmatprep.subr.mxu0 0.0
    %179 = vmatpush2.msra.mxu0 0.0
    %180 = vmatprep.subr.mxu0 0.0
    %181 = vmatpush2.msra.mxu0 0.0
    %182 = vmatprep.subr.mxu0 0.0
    %183 = vmatpush2.msra.mxu0 0.0
    %184 = vmatprep.subr.mxu0 0.0
    %185 = vmatpush2.msra.mxu0 0.0
    %186 = vmatprep.subr.mxu0 0.0
    %187 = vmatpush2.msra.mxu0 0.0
    %188 = vmatprep.subr.mxu0 0.0
    %189 = vmatpush2.msra.mxu0 0.0
    %190 = vmatprep.subr.mxu0 0.0
    %191 = vmatpush2.msra.mxu0 0.0
    %192 = vmatprep.subr.mxu0 0.0
    %193 = vmatpush2.msra.mxu0 0.0
    %194 = vmatprep.mubr.f32.mxu0 0.0
    %195 = vmatmul.mubr.f32.gmra.mxu0 %v128
    %v196 = vpop.f32.mrf.mxu0
    %v197 = vadd.f32 %v125, %v196
    %v198 = vpop.f32.mrf.mxu0
    %199 = vdwg.mxu0
    %v200 = vmax.f32 %v197, 0.0
    %v201 = vld [vmem:[#allocation4 + $0x38] sm:$0x7f]
    %v202 = vld [vmem:[#allocation4 + $0x40] sm:$0x1]
    %v203 = vlaneseq
    %v204 = vshrl.u32 %v203, 7
    %v205 = vsub.s32 0, %v204
    %v206 = vrot.slane %v202, %v205
    %vm207 = vcmask 56320
    %v209 = vsel %vm207, %v29, 0
    %v212 = vsel %vm207, %v30, 0
    %v215 = vsel %vm207, %v31, 0
    %vm217 = vcmask 1046528
    %v219 = vsel %vm217, %v201, 0
    %221 = vmatprep.subr.mxu0 0.0
    %222 = vmatpush1.msra.mxu0 0.0
    %223 = vmatprep.subr.mxu0 0.0
    %224 = vmatpush1.msra.mxu0 0.0
    %225 = vmatprep.subr.mxu0 0.0
    %226 = vmatpush1.msra.mxu0 0.0
    %227 = vmatprep.subr.mxu0 0.0
    %228 = vmatpush1.msra.mxu0 0.0
    %229 = vmatprep.subr.mxu0 0.0
    %230 = vmatpush1.msra.mxu0 0.0
    %231 = vmatprep.subr.mxu0 0.0
    %232 = vmatpush1.msra.mxu0 0.0
    %233 = vmatprep.subr.mxu0 0.0
    %234 = vmatpush1.msra.mxu0 0.0
    %235 = vmatprep.subr.mxu0 0.0
    %236 = vmatpush1.msra.mxu0 0.0
    %237 = vmatprep.subr.mxu0 0.0
    %238 = vmatpush1.msra.mxu0 0.0
    %239 = vmatprep.subr.mxu0 0.0
    %240 = vmatpush1.msra.mxu0 0.0
    %241 = vmatprep.subr.mxu0 0.0
    %242 = vmatpush1.msra.mxu0 0.0
    %243 = vmatprep.subr.mxu0 0.0
    %244 = vmatpush1.msra.mxu0 0.0
    %245 = vmatprep.subr.mxu0 0.0
    %246 = vmatpush1.msra.mxu0 0.0
    %247 = vmatprep.subr.mxu0 0.0
    %248 = vmatpush1.msra.mxu0 0.0
    %249 = vmatprep.subr.mxu0 0.0
    %250 = vmatpush1.msra.mxu0 0.0
    %251 = vmatprep.subr.mxu0 0.0
    %252 = vmatpush1.msra.mxu0 %v219
    %253 = vmatprep.subr.mxu0 0.0
    %254 = vmatpush2.msra.mxu0 0.0
    %255 = vmatprep.subr.mxu0 0.0
    %256 = vmatpush2.msra.mxu0 0.0
    %257 = vmatprep.subr.mxu0 0.0
    %258 = vmatpush2.msra.mxu0 0.0
    %259 = vmatprep.subr.mxu0 0.0
    %260 = vmatpush2.msra.mxu0 0.0
    %261 = vmatprep.subr.mxu0 0.0
    %262 = vmatpush2.msra.mxu0 0.0
    %263 = vmatprep.subr.mxu0 0.0
    %264 = vmatpush2.msra.mxu0 0.0
    %265 = vmatprep.subr.mxu0 0.0
    %266 = vmatpush2.msra.mxu0 0.0
    %267 = vmatprep.subr.mxu0 0.0
    %268 = vmatpush2.msra.mxu0 0.0
    %269 = vmatprep.subr.mxu0 0.0
    %270 = vmatpush2.msra.mxu0 0.0
    %271 = vmatprep.subr.mxu0 0.0
    %272 = vmatpush2.msra.mxu0 0.0
    %273 = vmatprep.subr.mxu0 0.0
    %274 = vmatpush2.msra.mxu0 0.0
    %275 = vmatprep.subr.mxu0 0.0
    %276 = vmatpush2.msra.mxu0 0.0
    %277 = vmatprep.subr.mxu0 0.0
    %278 = vmatpush2.msra.mxu0 0.0
    %279 = vmatprep.subr.mxu0 0.0
    %280 = vmatpush2.msra.mxu0 0.0
    %281 = vmatprep.subr.mxu0 0.0
    %282 = vmatpush2.msra.mxu0 0.0
    %283 = vmatprep.subr.mxu0 0.0
    %284 = vmatpush2.msra.mxu0 0.0
    %285 = vmatprep.mubr.f32.mxu0 0.0
    %286 = vmatmul.mubr.f32.gmra.mxu0 %v209
    %v287 = vpop.f32.mrf.mxu0
    %v288 = vadd.f32 %v206, %v287
    %v289 = vpop.f32.mrf.mxu0
    %290 = vmatprep.mubr.f32.mxu0 0.0
    %291 = vmatmul.mubr.f32.gmra.mxu0 %v212
    %v292 = vpop.f32.mrf.mxu0
    %v293 = vadd.f32 %v206, %v292
    %v294 = vpop.f32.mrf.mxu0
    %295 = vmatprep.mubr.f32.mxu0 0.0
    %296 = vmatmul.mubr.f32.gmra.mxu0 %v215
    %v297 = vpop.f32.mrf.mxu0
    %v298 = vadd.f32 %v206, %v297
    %v299 = vpop.f32.mrf.mxu0
    %300 = vdwg.mxu0
    %v301 = vmax.f32 %v288, 0.0
    %v302 = vmax.f32 %v293, 0.0
    %v303 = vmax.f32 %v298, 0.0
    %v304 = vld [vmem:[#allocation4 + $0x48] sm:$0xff]
    %v305 = vld [vmem:[#allocation4 + $0x50] sm:$0xff]
    %v306 = vld [vmem:[#allocation4 + $0x58] sm:$0xff]
    %v307 = vld [vmem:[#allocation4 + $0x60] sm:$0xff]
    %v308 = vld [vmem:[#allocation4 + $0x68] sm:$0x1]
    %v309 = vlaneseq
    %v310 = vshrl.u32 %v309, 7
    %v311 = vsub.s32 0, %v310
    %v312 = vrot.slane %v308, %v311
    %v314 = vsel %vm126, %v301, 0
    %v317 = vsel %vm126, %v302, 0
    %v320 = vsel %vm126, %v303, 0
    %322 = vmatprep.subr.mxu0 0.0
    %323 = vmatpush1.msra.mxu0 0.0
    %324 = vmatprep.subr.mxu0 0.0
    %325 = vmatpush1.msra.mxu0 0.0
    %326 = vmatprep.subr.mxu0 0.0
    %327 = vmatpush1.msra.mxu0 0.0
    %328 = vmatprep.subr.mxu0 0.0
    %329 = vmatpush1.msra.mxu0 0.0
    %330 = vmatprep.subr.mxu0 0.0
    %331 = vmatpush1.msra.mxu0 0.0
    %332 = vmatprep.subr.mxu0 0.0
    %333 = vmatpush1.msra.mxu0 0.0
    %334 = vmatprep.subr.mxu0 0.0
    %335 = vmatpush1.msra.mxu0 0.0
    %336 = vmatprep.subr.mxu0 0.0
    %337 = vmatpush1.msra.mxu0 0.0
    %338 = vmatprep.subr.mxu0 0.0
    %339 = vmatpush1.msra.mxu0 0.0
    %340 = vmatprep.subr.mxu0 0.0
    %341 = vmatpush1.msra.mxu0 0.0
    %342 = vmatprep.subr.mxu0 0.0
    %343 = vmatpush1.msra.mxu0 0.0
    %344 = vmatprep.subr.mxu0 0.0
    %345 = vmatpush1.msra.mxu0 0.0
    %346 = vmatprep.subr.mxu0 0.0
    %347 = vmatpush1.msra.mxu0 %v307
    %348 = vmatprep.subr.mxu0 0.0
    %349 = vmatpush1.msra.mxu0 %v306
    %350 = vmatprep.subr.mxu0 0.0
    %351 = vmatpush1.msra.mxu0 %v305
    %352 = vmatprep.subr.mxu0 0.0
    %353 = vmatpush1.msra.mxu0 %v304
    %354 = vmatprep.subr.mxu0 0.0
    %355 = vmatpush2.msra.mxu0 0.0
    %356 = vmatprep.subr.mxu0 0.0
    %357 = vmatpush2.msra.mxu0 0.0
    %358 = vmatprep.subr.mxu0 0.0
    %359 = vmatpush2.msra.mxu0 0.0
    %360 = vmatprep.subr.mxu0 0.0
    %361 = vmatpush2.msra.mxu0 0.0
    %362 = vmatprep.subr.mxu0 0.0
    %363 = vmatpush2.msra.mxu0 0.0
    %364 = vmatprep.subr.mxu0 0.0
    %365 = vmatpush2.msra.mxu0 0.0
    %366 = vmatprep.subr.mxu0 0.0
    %367 = vmatpush2.msra.mxu0 0.0
    %368 = vmatprep.subr.mxu0 0.0
    %369 = vmatpush2.msra.mxu0 0.0
    %370 = vmatprep.subr.mxu0 0.0
    %371 = vmatpush2.msra.mxu0 0.0
    %372 = vmatprep.subr.mxu0 0.0
    %373 = vmatpush2.msra.mxu0 0.0
    %374 = vmatprep.subr.mxu0 0.0
    %375 = vmatpush2.msra.mxu0 0.0
    %376 = vmatprep.subr.mxu0 0.0
    %377 = vmatpush2.msra.mxu0 0.0
    %378 = vmatprep.subr.mxu0 0.0
    %379 = vmatpush2.msra.mxu0 0.0
    %380 = vmatprep.subr.mxu0 0.0
    %381 = vmatpush2.msra.mxu0 0.0
    %382 = vmatprep.subr.mxu0 0.0
    %383 = vmatpush2.msra.mxu0 0.0
    %384 = vmatprep.subr.mxu0 0.0
    %385 = vmatpush2.msra.mxu0 0.0
    %386 = vmatprep.mubr.f32.mxu0 0.0
    %387 = vmatmul.mubr.f32.gmra.mxu0 %v314
    %v388 = vpop.f32.mrf.mxu0
    %v389 = vadd.f32 %v312, %v388
    %v390 = vpop.f32.mrf.mxu0
    %391 = vmatprep.mubr.f32.mxu0 0.0
    %392 = vmatmul.mubr.f32.gmra.mxu0 %v317
    %v393 = vpop.f32.mrf.mxu0
    %v394 = vadd.f32 %v312, %v393
    %v395 = vpop.f32.mrf.mxu0
    %396 = vmatprep.mubr.f32.mxu0 0.0
    %397 = vmatmul.mubr.f32.gmra.mxu0 %v320
    %v398 = vpop.f32.mrf.mxu0
    %v399 = vadd.f32 %v312, %v398
    %v400 = vpop.f32.mrf.mxu0
    %401 = vdwg.mxu0
    %v402 = vmax.f32 %v389, 0.0
    %v403 = vmax.f32 %v394, 0.0
    %v404 = vmax.f32 %v399, 0.0
    %405 = vst.msk [vmem:[#allocation2] sm:$0xff] %vm126, %v402
    %406 = vst.msk [vmem:[#allocation2 + $0x8] sm:$0xff] %vm126, %v403
    %vm407 = vcmask 257024
    %408 = vst.msk [vmem:[#allocation2 + $0x10] sm:$0xf] %vm407, %v404
    %v409 = vld [vmem:[#allocation2] ss:$5 sm:$0xf]
    %s410 = scalar_lea.vmem [#allocation2], 1
    %v411 = vld [vmem:[%s410] ss:$5 sm:$0xf]
    %v412 = vadd.f32 %v409, %v411
    %s413 = scalar_lea.vmem [#allocation2], 2
    %v414 = vld [vmem:[%s413] ss:$5 sm:$0xf]
    %v415 = vadd.f32 %v412, %v414
    %s416 = scalar_lea.vmem [#allocation2], 3
    %v417 = vld [vmem:[%s416] ss:$5 sm:$0xf]
    %v418 = vadd.f32 %v415, %v417
    %s419 = scalar_lea.vmem [#allocation2], 4
    %v420 = vld [vmem:[%s419] ss:$5 sm:$0xf]
    %v421 = vadd.f32 %v418, %v420
    %423 = vrot.lane.b32.xlu0 %v421, 32
    %v424 = vpop.permute.xlu0 %423
    %v426 = vsel %vm126, %v200, %v424
    %v427 = vld [vmem:[#allocation4 + $0x70] sm:$0xff]
    %v428 = vld [vmem:[#allocation4 + $0x78] sm:$0xff]
    %v429 = vld [vmem:[#allocation4 + $0x80] sm:$0xff]
    %v430 = vld [vmem:[#allocation4 + $0x88] sm:$0xff]
    %v431 = vld [vmem:[#allocation4 + $0x90] sm:$0xff]
    %v432 = vld [vmem:[#allocation4 + $0x98] sm:$0xff]
    %v433 = vld [vmem:[#allocation4 + $0xa0] sm:$0xff]
    %v434 = vld [vmem:[#allocation4 + $0xa8] sm:$0xff]
    %v435 = vld [vmem:[#allocation4 + $0xb0] sm:$0x1]
    %v436 = vlaneseq
    %v437 = vshrl.u32 %v436, 7
    %v438 = vsub.s32 0, %v437
    %v439 = vrot.slane %v435, %v438
    %vm440 = vcmask 523264
    %v442 = vsel %vm440, %v426, 0
    %444 = vmatprep.subr.mxu0 0.0
    %445 = vmatpush1.msra.mxu0 0.0
    %446 = vmatprep.subr.mxu0 0.0
    %447 = vmatpush1.msra.mxu0 0.0
    %448 = vmatprep.subr.mxu0 0.0
    %449 = vmatpush1.msra.mxu0 0.0
    %450 = vmatprep.subr.mxu0 0.0
    %451 = vmatpush1.msra.mxu0 0.0
    %452 = vmatprep.subr.mxu0 0.0
    %453 = vmatpush1.msra.mxu0 0.0
    %454 = vmatprep.subr.mxu0 0.0
    %455 = vmatpush1.msra.mxu0 0.0
    %456 = vmatprep.subr.mxu0 0.0
    %457 = vmatpush1.msra.mxu0 0.0
    %458 = vmatprep.subr.mxu0 0.0
    %459 = vmatpush1.msra.mxu0 0.0
    %460 = vmatprep.subr.mxu0 0.0
    %461 = vmatpush1.msra.mxu0 %v434
    %462 = vmatprep.subr.mxu0 0.0
    %463 = vmatpush1.msra.mxu0 %v433
    %464 = vmatprep.subr.mxu0 0.0
    %465 = vmatpush1.msra.mxu0 %v432
    %466 = vmatprep.subr.mxu0 0.0
    %467 = vmatpush1.msra.mxu0 %v431
    %468 = vmatprep.subr.mxu0 0.0
    %469 = vmatpush1.msra.mxu0 %v430
    %470 = vmatprep.subr.mxu0 0.0
    %471 = vmatpush1.msra.mxu0 %v429
    %472 = vmatprep.subr.mxu0 0.0
    %473 = vmatpush1.msra.mxu0 %v428
    %474 = vmatprep.subr.mxu0 0.0
    %475 = vmatpush1.msra.mxu0 %v427
    %476 = vmatprep.subr.mxu0 0.0
    %477 = vmatpush2.msra.mxu0 0.0
    %478 = vmatprep.subr.mxu0 0.0
    %479 = vmatpush2.msra.mxu0 0.0
    %480 = vmatprep.subr.mxu0 0.0
    %481 = vmatpush2.msra.mxu0 0.0
    %482 = vmatprep.subr.mxu0 0.0
    %483 = vmatpush2.msra.mxu0 0.0
    %484 = vmatprep.subr.mxu0 0.0
    %485 = vmatpush2.msra.mxu0 0.0
    %486 = vmatprep.subr.mxu0 0.0
    %487 = vmatpush2.msra.mxu0 0.0
    %488 = vmatprep.subr.mxu0 0.0
    %489 = vmatpush2.msra.mxu0 0.0
    %490 = vmatprep.subr.mxu0 0.0
    %491 = vmatpush2.msra.mxu0 0.0
    %492 = vmatprep.subr.mxu0 0.0
    %493 = vmatpush2.msra.mxu0 0.0
    %494 = vmatprep.subr.mxu0 0.0
    %495 = vmatpush2.msra.mxu0 0.0
    %496 = vmatprep.subr.mxu0 0.0
    %497 = vmatpush2.msra.mxu0 0.0
    %498 = vmatprep.subr.mxu0 0.0
    %499 = vmatpush2.msra.mxu0 0.0
    %500 = vmatprep.subr.mxu0 0.0
    %501 = vmatpush2.msra.mxu0 0.0
    %502 = vmatprep.subr.mxu0 0.0
    %503 = vmatpush2.msra.mxu0 0.0
    %504 = vmatprep.subr.mxu0 0.0
    %505 = vmatpush2.msra.mxu0 0.0
    %506 = vmatprep.subr.mxu0 0.0
    %507 = vmatpush2.msra.mxu0 0.0
    %508 = vmatprep.mubr.f32.mxu0 0.0
    %509 = vmatmul.mubr.f32.gmra.mxu0 %v442
    %v510 = vpop.f32.mrf.mxu0
    %v511 = vadd.f32 %v439, %v510
    %v512 = vpop.f32.mrf.mxu0
    %513 = vdwg.mxu0
    %v514 = vmax.f32 %v511, 0.0
    %v515 = vld [vmem:[#allocation4 + $0xb8] sm:$0xff]
    %v516 = vld [vmem:[#allocation4 + $0xc0] sm:$0xff]
    %v517 = vld [vmem:[#allocation4 + $0xc8] sm:$0xff]
    %v518 = vld [vmem:[#allocation4 + $0xd0] sm:$0xff]
    %v519 = vld [vmem:[#allocation4 + $0xd8] sm:$0xff]
    %v520 = vld [vmem:[#allocation4 + $0xe0] sm:$0xff]
    %v521 = vld [vmem:[#allocation4 + $0xe8] sm:$0xff]
    %v522 = vld [vmem:[#allocation4 + $0xf0] sm:$0xff]
    %v523 = vld [vmem:[#allocation4 + $0xf8] sm:$0x1]
    %v524 = vlaneseq
    %v525 = vshrl.u32 %v524, 7
    %v526 = vsub.s32 0, %v525
    %v527 = vrot.slane %v523, %v526
    %528 = vmatprep.subr.mxu0 0.0
    %529 = vmatpush1.msra.mxu0 0.0
    %530 = vmatprep.subr.mxu0 0.0
    %531 = vmatpush1.msra.mxu0 0.0
    %532 = vmatprep.subr.mxu0 0.0
    %533 = vmatpush1.msra.mxu0 0.0
    %534 = vmatprep.subr.mxu0 0.0
    %535 = vmatpush1.msra.mxu0 0.0
    %536 = vmatprep.subr.mxu0 0.0
    %537 = vmatpush1.msra.mxu0 0.0
    %538 = vmatprep.subr.mxu0 0.0
    %539 = vmatpush1.msra.mxu0 0.0
    %540 = vmatprep.subr.mxu0 0.0
    %541 = vmatpush1.msra.mxu0 0.0
    %542 = vmatprep.subr.mxu0 0.0
    %543 = vmatpush1.msra.mxu0 0.0
    %544 = vmatprep.subr.mxu0 0.0
    %545 = vmatpush1.msra.mxu0 %v522
    %546 = vmatprep.subr.mxu0 0.0
    %547 = vmatpush1.msra.mxu0 %v521
    %548 = vmatprep.subr.mxu0 0.0
    %549 = vmatpush1.msra.mxu0 %v520
    %550 = vmatprep.subr.mxu0 0.0
    %551 = vmatpush1.msra.mxu0 %v519
    %552 = vmatprep.subr.mxu0 0.0
    %553 = vmatpush1.msra.mxu0 %v518
    %554 = vmatprep.subr.mxu0 0.0
    %555 = vmatpush1.msra.mxu0 %v517
    %556 = vmatprep.subr.mxu0 0.0
    %557 = vmatpush1.msra.mxu0 %v516
    %558 = vmatprep.subr.mxu0 0.0
    %559 = vmatpush1.msra.mxu0 %v515
    %560 = vmatprep.subr.mxu0 0.0
    %561 = vmatpush2.msra.mxu0 0.0
    %562 = vmatprep.subr.mxu0 0.0
    %563 = vmatpush2.msra.mxu0 0.0
    %564 = vmatprep.subr.mxu0 0.0
    %565 = vmatpush2.msra.mxu0 0.0
    %566 = vmatprep.subr.mxu0 0.0
    %567 = vmatpush2.msra.mxu0 0.0
    %568 = vmatprep.subr.mxu0 0.0
    %569 = vmatpush2.msra.mxu0 0.0
    %570 = vmatprep.subr.mxu0 0.0
    %571 = vmatpush2.msra.mxu0 0.0
    %572 = vmatprep.subr.mxu0 0.0
    %573 = vmatpush2.msra.mxu0 0.0
    %574 = vmatprep.subr.mxu0 0.0
    %575 = vmatpush2.msra.mxu0 0.0
    %576 = vmatprep.subr.mxu0 0.0
    %577 = vmatpush2.msra.mxu0 0.0
    %578 = vmatprep.subr.mxu0 0.0
    %579 = vmatpush2.msra.mxu0 0.0
    %580 = vmatprep.subr.mxu0 0.0
    %581 = vmatpush2.msra.mxu0 0.0
    %582 = vmatprep.subr.mxu0 0.0
    %583 = vmatpush2.msra.mxu0 0.0
    %584 = vmatprep.subr.mxu0 0.0
    %585 = vmatpush2.msra.mxu0 0.0
    %586 = vmatprep.subr.mxu0 0.0
    %587 = vmatpush2.msra.mxu0 0.0
    %588 = vmatprep.subr.mxu0 0.0
    %589 = vmatpush2.msra.mxu0 0.0
    %590 = vmatprep.subr.mxu0 0.0
    %591 = vmatpush2.msra.mxu0 0.0
    %592 = vmatprep.mubr.f32.mxu0 0.0
    %593 = vmatmul.mubr.f32.gmra.mxu0 %v442
    %v594 = vpop.f32.mrf.mxu0
    %v595 = vadd.f32 %v527, %v594
    %v596 = vpop.f32.mrf.mxu0
    %597 = vdwg.mxu0
    %v598 = vld [vmem:[#allocation4 + $0x100] sm:$0xff]
    %v599 = vld [vmem:[#allocation4 + $0x108] sm:$0xff]
    %v600 = vld [vmem:[#allocation4 + $0x110] sm:$0xff]
    %v601 = vld [vmem:[#allocation4 + $0x118] sm:$0xff]
    %v603 = vsel %vm126, %v402, 0
    %v606 = vsel %vm126, %v403, 0
    %v609 = vsel %vm126, %v404, 0
    %611 = vmatprep.subr.mxu0 0.0
    %612 = vmatpush1.msra.mxu0 0.0
    %613 = vmatprep.subr.mxu0 0.0
    %614 = vmatpush1.msra.mxu0 0.0
    %615 = vmatprep.subr.mxu0 0.0
    %616 = vmatpush1.msra.mxu0 0.0
    %617 = vmatprep.subr.mxu0 0.0
    %618 = vmatpush1.msra.mxu0 0.0
    %619 = vmatprep.subr.mxu0 0.0
    %620 = vmatpush1.msra.mxu0 0.0
    %621 = vmatprep.subr.mxu0 0.0
    %622 = vmatpush1.msra.mxu0 0.0
    %623 = vmatprep.subr.mxu0 0.0
    %624 = vmatpush1.msra.mxu0 0.0
    %625 = vmatprep.subr.mxu0 0.0
    %626 = vmatpush1.msra.mxu0 0.0
    %627 = vmatprep.subr.mxu0 0.0
    %628 = vmatpush1.msra.mxu0 0.0
    %629 = vmatprep.subr.mxu0 0.0
    %630 = vmatpush1.msra.mxu0 0.0
    %631 = vmatprep.subr.mxu0 0.0
    %632 = vmatpush1.msra.mxu0 0.0
    %633 = vmatprep.subr.mxu0 0.0
    %634 = vmatpush1.msra.mxu0 0.0
    %635 = vmatprep.subr.mxu0 0.0
    %636 = vmatpush1.msra.mxu0 %v601
    %637 = vmatprep.subr.mxu0 0.0
    %638 = vmatpush1.msra.mxu0 %v600
    %639 = vmatprep.subr.mxu0 0.0
    %640 = vmatpush1.msra.mxu0 %v599
    %641 = vmatprep.subr.mxu0 0.0
    %642 = vmatpush1.msra.mxu0 %v598
    %643 = vmatprep.subr.mxu0 0.0
    %644 = vmatpush2.msra.mxu0 0.0
    %645 = vmatprep.subr.mxu0 0.0
    %646 = vmatpush2.msra.mxu0 0.0
    %647 = vmatprep.subr.mxu0 0.0
    %648 = vmatpush2.msra.mxu0 0.0
    %649 = vmatprep.subr.mxu0 0.0
    %650 = vmatpush2.msra.mxu0 0.0
    %651 = vmatprep.subr.mxu0 0.0
    %652 = vmatpush2.msra.mxu0 0.0
    %653 = vmatprep.subr.mxu0 0.0
    %654 = vmatpush2.msra.mxu0 0.0
    %655 = vmatprep.subr.mxu0 0.0
    %656 = vmatpush2.msra.mxu0 0.0
    %657 = vmatprep.subr.mxu0 0.0
    %658 = vmatpush2.msra.mxu0 0.0
    %659 = vmatprep.subr.mxu0 0.0
    %660 = vmatpush2.msra.mxu0 0.0
    %661 = vmatprep.subr.mxu0 0.0
    %662 = vmatpush2.msra.mxu0 0.0
    %663 = vmatprep.subr.mxu0 0.0
    %664 = vmatpush2.msra.mxu0 0.0
    %665 = vmatprep.subr.mxu0 0.0
    %666 = vmatpush2.msra.mxu0 0.0
    %667 = vmatprep.subr.mxu0 0.0
    %668 = vmatpush2.msra.mxu0 0.0
    %669 = vmatprep.subr.mxu0 0.0
    %670 = vmatpush2.msra.mxu0 0.0
    %671 = vmatprep.subr.mxu0 0.0
    %672 = vmatpush2.msra.mxu0 0.0
    %673 = vmatprep.subr.mxu0 0.0
    %674 = vmatpush2.msra.mxu0 0.0
    %675 = vmatprep.mubr.f32.mxu0 0.0
    %676 = vmatmul.mubr.f32.gmra.mxu0 %v603
    %v677 = vpop.f32.mrf.mxu0
    %v678 = vadd.f32 0.0, %v677
    %v679 = vpop.f32.mrf.mxu0
    %680 = vmatprep.mubr.f32.mxu0 0.0
    %681 = vmatmul.mubr.f32.gmra.mxu0 %v606
    %v682 = vpop.f32.mrf.mxu0
    %v683 = vadd.f32 0.0, %v682
    %v684 = vpop.f32.mrf.mxu0
    %685 = vmatprep.mubr.f32.mxu0 0.0
    %686 = vmatmul.mubr.f32.gmra.mxu0 %v609
    %v687 = vpop.f32.mrf.mxu0
    %v688 = vadd.f32 0.0, %v687
    %v689 = vpop.f32.mrf.mxu0
    %690 = vdwg.mxu0
    %vm691 = vcmask 408576
    %692 = vst.msk [vmem:[#allocation3] sm:$0xff] %vm691, %v678
    %693 = vst.msk [vmem:[#allocation3 + $0x8] sm:$0xff] %vm691, %v683
    %vm694 = vcmask 404480
    %695 = vst.msk [vmem:[#allocation3 + $0x10] sm:$0xf] %vm694, %v688
    %v696 = vld [vmem:[#allocation3] ss:$5 sm:$0xf]
    %v697 = vadd.f32 %v696, %v595
    %v698 = vmax.f32 %v697, 0.0
    %s699 = scalar_lea.vmem [#allocation3], 1
    %v700 = vld [vmem:[%s699] ss:$5 sm:$0xf]
    %v701 = vadd.f32 %v700, %v595
    %v702 = vmax.f32 %v701, 0.0
    %v703 = vadd.f32 %v698, %v702
    %s704 = scalar_lea.vmem [#allocation3], 2
    %v705 = vld [vmem:[%s704] ss:$5 sm:$0xf]
    %v706 = vadd.f32 %v705, %v595
    %v707 = vmax.f32 %v706, 0.0
    %v708 = vadd.f32 %v703, %v707
    %s709 = scalar_lea.vmem [#allocation3], 3
    %v710 = vld [vmem:[%s709] ss:$5 sm:$0xf]
    %v711 = vadd.f32 %v710, %v595
    %v712 = vmax.f32 %v711, 0.0
    %v713 = vadd.f32 %v708, %v712
    %s714 = scalar_lea.vmem [#allocation3], 4
    %v715 = vld [vmem:[%s714] ss:$5 sm:$0xf]
    %v716 = vadd.f32 %v715, %v595
    %v717 = vmax.f32 %v716, 0.0
    %v718 = vadd.f32 %v713, %v717
    %720 = vrot.lane.b32.xlu0 %v718, 50
    %v721 = vpop.permute.xlu0 %720
    %v723 = vsel %vm691, %v514, %v721
    %v724 = vld [vmem:[#allocation4 + $0x120] sm:$0xff]
    %v725 = vld [vmem:[#allocation4 + $0x128] sm:$0xff]
    %v726 = vld [vmem:[#allocation4 + $0x130] sm:$0xff]
    %v727 = vld [vmem:[#allocation4 + $0x138] sm:$0xff]
    %v728 = vld [vmem:[#allocation4 + $0x140] sm:$0xff]
    %v729 = vld [vmem:[#allocation4 + $0x148] sm:$0xff]
    %v730 = vld [vmem:[#allocation4 + $0x150] sm:$0xff]
    %v731 = vld [vmem:[#allocation4 + $0x158] sm:$0xff]
    %v732 = vld [vmem:[#allocation4 + $0x160] sm:$0xff]
    %v733 = vld [vmem:[#allocation4 + $0x168] sm:$0xff]
    %v734 = vld [vmem:[#allocation4 + $0x170] sm:$0xff]
    %v735 = vld [vmem:[#allocation4 + $0x178] sm:$0xff]
    %v736 = vld [vmem:[#allocation4 + $0x180] sm:$0xf]
    %v737 = vld [vmem:[#allocation4 + $0x188] sm:$0x1]
    %v738 = vlaneseq
    %v739 = vshrl.u32 %v738, 7
    %v740 = vsub.s32 0, %v739
    %v741 = vrot.slane %v737, %v740
    %vm742 = vcmask 818176
    %v744 = vsel %vm742, %v723, 0
    %vm746 = vcmask 1043456
    %v748 = vsel %vm746, %v736, 0
    %750 = vmatprep.subr.mxu0 0.0
    %751 = vmatpush1.msra.mxu0 0.0
    %752 = vmatprep.subr.mxu0 0.0
    %753 = vmatpush1.msra.mxu0 0.0
    %754 = vmatprep.subr.mxu0 0.0
    %755 = vmatpush1.msra.mxu0 0.0
    %756 = vmatprep.subr.mxu0 0.0
    %757 = vmatpush1.msra.mxu0 %v748
    %758 = vmatprep.subr.mxu0 0.0
    %759 = vmatpush1.msra.mxu0 %v735
    %760 = vmatprep.subr.mxu0 0.0
    %761 = vmatpush1.msra.mxu0 %v734
    %762 = vmatprep.subr.mxu0 0.0
    %763 = vmatpush1.msra.mxu0 %v733
    %764 = vmatprep.subr.mxu0 0.0
    %765 = vmatpush1.msra.mxu0 %v732
    %766 = vmatprep.subr.mxu0 0.0
    %767 = vmatpush1.msra.mxu0 %v731
    %768 = vmatprep.subr.mxu0 0.0
    %769 = vmatpush1.msra.mxu0 %v730
    %770 = vmatprep.subr.mxu0 0.0
    %771 = vmatpush1.msra.mxu0 %v729
    %772 = vmatprep.subr.mxu0 0.0
    %773 = vmatpush1.msra.mxu0 %v728
    %774 = vmatprep.subr.mxu0 0.0
    %775 = vmatpush1.msra.mxu0 %v727
    %776 = vmatprep.subr.mxu0 0.0
    %777 = vmatpush1.msra.mxu0 %v726
    %778 = vmatprep.subr.mxu0 0.0
    %779 = vmatpush1.msra.mxu0 %v725
    %780 = vmatprep.subr.mxu0 0.0
    %781 = vmatpush1.msra.mxu0 %v724
    %782 = vmatprep.subr.mxu0 0.0
    %783 = vmatpush2.msra.mxu0 0.0
    %784 = vmatprep.subr.mxu0 0.0
    %785 = vmatpush2.msra.mxu0 0.0
    %786 = vmatprep.subr.mxu0 0.0
    %787 = vmatpush2.msra.mxu0 0.0
    %788 = vmatprep.subr.mxu0 0.0
    %789 = vmatpush2.msra.mxu0 0.0
    %790 = vmatprep.subr.mxu0 0.0
    %791 = vmatpush2.msra.mxu0 0.0
    %792 = vmatprep.subr.mxu0 0.0
    %793 = vmatpush2.msra.mxu0 0.0
    %794 = vmatprep.subr.mxu0 0.0
    %795 = vmatpush2.msra.mxu0 0.0
    %796 = vmatprep.subr.mxu0 0.0
    %797 = vmatpush2.msra.mxu0 0.0
    %798 = vmatprep.subr.mxu0 0.0
    %799 = vmatpush2.msra.mxu0 0.0
    %800 = vmatprep.subr.mxu0 0.0
    %801 = vmatpush2.msra.mxu0 0.0
    %802 = vmatprep.subr.mxu0 0.0
    %803 = vmatpush2.msra.mxu0 0.0
    %804 = vmatprep.subr.mxu0 0.0
    %805 = vmatpush2.msra.mxu0 0.0
    %806 = vmatprep.subr.mxu0 0.0
    %807 = vmatpush2.msra.mxu0 0.0
    %808 = vmatprep.subr.mxu0 0.0
    %809 = vmatpush2.msra.mxu0 0.0
    %810 = vmatprep.subr.mxu0 0.0
    %811 = vmatpush2.msra.mxu0 0.0
    %812 = vmatprep.subr.mxu0 0.0
    %813 = vmatpush2.msra.mxu0 0.0
    %814 = vmatprep.mubr.f32.mxu0 0.0
    %815 = vmatmul.mubr.f32.gmra.mxu0 %v744
    %v816 = vpop.f32.mrf.mxu0
    %v817 = vadd.f32 %v741, %v816
    %v818 = vpop.f32.mrf.mxu0
    %819 = vdwg.mxu0
    %v820 = vmax.f32 %v817, 0.0
    %v821 = vld [vmem:[#allocation4 + $0x190] sm:$0xff]
    %v822 = vld [vmem:[#allocation4 + $0x198] sm:$0xff]
    %v823 = vld [vmem:[#allocation4 + $0x1a0] sm:$0xff]
    %v824 = vld [vmem:[#allocation4 + $0x1a8] sm:$0xff]
    %v825 = vld [vmem:[#allocation4 + $0x1b0] sm:$0x1]
    %v826 = vlaneseq
    %v827 = vshrl.u32 %v826, 7
    %v828 = vsub.s32 0, %v827
    %v829 = vrot.slane %v825, %v828
    %v831 = vsel %vm126, %v820, 0
    %833 = vmatprep.subr.mxu0 0.0
    %834 = vmatpush1.msra.mxu0 0.0
    %835 = vmatprep.subr.mxu0 0.0
    %836 = vmatpush1.msra.mxu0 0.0
    %837 = vmatprep.subr.mxu0 0.0
    %838 = vmatpush1.msra.mxu0 0.0
    %839 = vmatprep.subr.mxu0 0.0
    %840 = vmatpush1.msra.mxu0 0.0
    %841 = vmatprep.subr.mxu0 0.0
    %842 = vmatpush1.msra.mxu0 0.0
    %843 = vmatprep.subr.mxu0 0.0
    %844 = vmatpush1.msra.mxu0 0.0
    %845 = vmatprep.subr.mxu0 0.0
    %846 = vmatpush1.msra.mxu0 0.0
    %847 = vmatprep.subr.mxu0 0.0
    %848 = vmatpush1.msra.mxu0 0.0
    %849 = vmatprep.subr.mxu0 0.0
    %850 = vmatpush1.msra.mxu0 0.0
    %851 = vmatprep.subr.mxu0 0.0
    %852 = vmatpush1.msra.mxu0 0.0
    %853 = vmatprep.subr.mxu0 0.0
    %854 = vmatpush1.msra.mxu0 0.0
    %855 = vmatprep.subr.mxu0 0.0
    %856 = vmatpush1.msra.mxu0 0.0
    %857 = vmatprep.subr.mxu0 0.0
    %858 = vmatpush1.msra.mxu0 %v824
    %859 = vmatprep.subr.mxu0 0.0
    %860 = vmatpush1.msra.mxu0 %v823
    %861 = vmatprep.subr.mxu0 0.0
    %862 = vmatpush1.msra.mxu0 %v822
    %863 = vmatprep.subr.mxu0 0.0
    %864 = vmatpush1.msra.mxu0 %v821
    %865 = vmatprep.subr.mxu0 0.0
    %866 = vmatpush2.msra.mxu0 0.0
    %867 = vmatprep.subr.mxu0 0.0
    %868 = vmatpush2.msra.mxu0 0.0
    %869 = vmatprep.subr.mxu0 0.0
    %870 = vmatpush2.msra.mxu0 0.0
    %871 = vmatprep.subr.mxu0 0.0
    %872 = vmatpush2.msra.mxu0 0.0
    %873 = vmatprep.subr.mxu0 0.0
    %874 = vmatpush2.msra.mxu0 0.0
    %875 = vmatprep.subr.mxu0 0.0
    %876 = vmatpush2.msra.mxu0 0.0
    %877 = vmatprep.subr.mxu0 0.0
    %878 = vmatpush2.msra.mxu0 0.0
    %879 = vmatprep.subr.mxu0 0.0
    %880 = vmatpush2.msra.mxu0 0.0
    %881 = vmatprep.subr.mxu0 0.0
    %882 = vmatpush2.msra.mxu0 0.0
    %883 = vmatprep.subr.mxu0 0.0
    %884 = vmatpush2.msra.mxu0 0.0
    %885 = vmatprep.subr.mxu0 0.0
    %886 = vmatpush2.msra.mxu0 0.0
    %887 = vmatprep.subr.mxu0 0.0
    %888 = vmatpush2.msra.mxu0 0.0
    %889 = vmatprep.subr.mxu0 0.0
    %890 = vmatpush2.msra.mxu0 0.0
    %891 = vmatprep.subr.mxu0 0.0
    %892 = vmatpush2.msra.mxu0 0.0
    %893 = vmatprep.subr.mxu0 0.0
    %894 = vmatpush2.msra.mxu0 0.0
    %895 = vmatprep.subr.mxu0 0.0
    %896 = vmatpush2.msra.mxu0 0.0
    %897 = vmatprep.mubr.f32.mxu0 0.0
    %898 = vmatmul.mubr.f32.gmra.mxu0 %v831
    %v899 = vpop.f32.mrf.mxu0
    %v900 = vadd.f32 %v829, %v899
    %v901 = vpop.f32.mrf.mxu0
    %902 = vdwg.mxu0
    %v903 = vmax.f32 %v900, 0.0
    %v904 = vld [vmem:[#allocation4 + $0x1b8] sm:$0xff]
    %v905 = vld [vmem:[#allocation4 + $0x1c0] sm:$0xff]
    %v906 = vld [vmem:[#allocation4 + $0x1c8] sm:$0xff]
    %v907 = vld [vmem:[#allocation4 + $0x1d0] sm:$0xff]
    %v908 = vld [vmem:[#allocation4 + $0x1d8] sm:$0x1]
    %v909 = vlaneseq
    %v910 = vshrl.u32 %v909, 7
    %v911 = vsub.s32 0, %v910
    %v912 = vrot.slane %v908, %v911
    %v914 = vsel %vm126, %v903, 0
    %916 = vmatprep.subr.mxu0 0.0
    %917 = vmatpush1.msra.mxu0 0.0
    %918 = vmatprep.subr.mxu0 0.0
    %919 = vmatpush1.msra.mxu0 0.0
    %920 = vmatprep.subr.mxu0 0.0
    %921 = vmatpush1.msra.mxu0 0.0
    %922 = vmatprep.subr.mxu0 0.0
    %923 = vmatpush1.msra.mxu0 0.0
    %924 = vmatprep.subr.mxu0 0.0
    %925 = vmatpush1.msra.mxu0 0.0
    %926 = vmatprep.subr.mxu0 0.0
    %927 = vmatpush1.msra.mxu0 0.0
    %928 = vmatprep.subr.mxu0 0.0
    %929 = vmatpush1.msra.mxu0 0.0
    %930 = vmatprep.subr.mxu0 0.0
    %931 = vmatpush1.msra.mxu0 0.0
    %932 = vmatprep.subr.mxu0 0.0
    %933 = vmatpush1.msra.mxu0 0.0
    %934 = vmatprep.subr.mxu0 0.0
    %935 = vmatpush1.msra.mxu0 0.0
    %936 = vmatprep.subr.mxu0 0.0
    %937 = vmatpush1.msra.mxu0 0.0
    %938 = vmatprep.subr.mxu0 0.0
    %939 = vmatpush1.msra.mxu0 0.0
    %940 = vmatprep.subr.mxu0 0.0
    %941 = vmatpush1.msra.mxu0 %v907
    %942 = vmatprep.subr.mxu0 0.0
    %943 = vmatpush1.msra.mxu0 %v906
    %944 = vmatprep.subr.mxu0 0.0
    %945 = vmatpush1.msra.mxu0 %v905
    %946 = vmatprep.subr.mxu0 0.0
    %947 = vmatpush1.msra.mxu0 %v904
    %948 = vmatprep.subr.mxu0 0.0
    %949 = vmatpush2.msra.mxu0 0.0
    %950 = vmatprep.subr.mxu0 0.0
    %951 = vmatpush2.msra.mxu0 0.0
    %952 = vmatprep.subr.mxu0 0.0
    %953 = vmatpush2.msra.mxu0 0.0
    %954 = vmatprep.subr.mxu0 0.0
    %955 = vmatpush2.msra.mxu0 0.0
    %956 = vmatprep.subr.mxu0 0.0
    %957 = vmatpush2.msra.mxu0 0.0
    %958 = vmatprep.subr.mxu0 0.0
    %959 = vmatpush2.msra.mxu0 0.0
    %960 = vmatprep.subr.mxu0 0.0
    %961 = vmatpush2.msra.mxu0 0.0
    %962 = vmatprep.subr.mxu0 0.0
    %963 = vmatpush2.msra.mxu0 0.0
    %964 = vmatprep.subr.mxu0 0.0
    %965 = vmatpush2.msra.mxu0 0.0
    %966 = vmatprep.subr.mxu0 0.0
    %967 = vmatpush2.msra.mxu0 0.0
    %968 = vmatprep.subr.mxu0 0.0
    %969 = vmatpush2.msra.mxu0 0.0
    %970 = vmatprep.subr.mxu0 0.0
    %971 = vmatpush2.msra.mxu0 0.0
    %972 = vmatprep.subr.mxu0 0.0
    %973 = vmatpush2.msra.mxu0 0.0
    %974 = vmatprep.subr.mxu0 0.0
    %975 = vmatpush2.msra.mxu0 0.0
    %976 = vmatprep.subr.mxu0 0.0
    %977 = vmatpush2.msra.mxu0 0.0
    %978 = vmatprep.subr.mxu0 0.0
    %979 = vmatpush2.msra.mxu0 0.0
    %980 = vmatprep.mubr.f32.mxu0 0.0
    %981 = vmatmul.mubr.f32.gmra.mxu0 %v914
    %v982 = vpop.f32.mrf.mxu0
    %v983 = vadd.f32 %v912, %v982
    %v984 = vpop.f32.mrf.mxu0
    %985 = vdwg.mxu0
    %vm986 = vcmask 3072
    %987 = vst.msk [vmem:[%s3] sm:$0xf] %vm986, %v983
    // Predicated region
    $region18: #{tpu_custom_call.1} parent=1 // pred_check
      _
    $region19: #{tpu_custom_call.1} parent=1 // pred_check_branch
      %989 = sbr.rel (0) target = $region21
    $region20: #{tpu_custom_call.1} parent=1 // pred_region
      _
    $region21: #{tpu_custom_call.1} parent=1 // pred_fallthru
      _
    // Predicated region
    $region22: #{tpu_custom_call.1} parent=1 // pred_check
      _
    $region23: #{tpu_custom_call.1} parent=1 // pred_check_branch
      %991 = sbr.rel (0) target = $region25
    $region24: #{tpu_custom_call.1} parent=1 // pred_region
      _
    $region25: #{tpu_custom_call.1} parent=1 // pred_fallthru
      _
    %992 = vsyncpa [#allocation5], 1

</llo_original>
